<compile_context>
chip_gen: v5e
topology: v5e:2x2
jax: 0.10.0
libtpu: 0.0.40
codegen_flags: <defaults>
</compile_context>

<pallas_src>
import math

import jax
import jax.numpy as jnp
from jax.experimental import pallas as pl
from jax.experimental.pallas import tpu as pltpu


def _round_up(x, m):
    return ((x + m - 1) // m) * m


def _choose_tiling(B, max_batch_tile):
    """Pick (tile_b, padded_B, n_tiles) for the 1-D batch grid.

    - tile_b is a multiple of 8 sublanes and <= ~max_batch_tile.
    - For B >= 16 we force >= 2 grid steps so v7x megacore has work for both
      TensorCores (harmless elsewhere).
    - n_tiles is re-derived from tile_b so the trailing tile is never mostly
      padding (e.g. B=600 -> tile_b=304, Bp=608, not Bp=1024).
    """
    n_tiles = max(1, -(-B // max_batch_tile))          # ceil(B / max_tile)
    if n_tiles == 1 and B >= 16:
        n_tiles = 2                                     # megacore on v7x
    tile_b = _round_up(-(-B // n_tiles), 8)             # ceil(B / n_tiles) -> x8
    n_tiles = -(-B // tile_b)                           # re-derive: minimal padding
    return tile_b, tile_b * n_tiles, n_tiles


def actor_kernel(x_ref, w1_ref, b1_ref, w2_ref, b2_ref, w3_ref, b3_ref, out_ref):
    """One batch tile: fc1 -> ReLU -> fc2 -> ReLU -> fc3 -> tanh (narrow store)."""
    act = out_ref.shape[-1]                               # true action_size
    x = x_ref[...].astype(jnp.bfloat16)                   # (tB, S): VPU cast, free
    # fc1 + ReLU  (bf16 MXU operands, f32 accumulate; bias/ReLU in f32)
    h1 = jnp.dot(x, w1_ref[...], preferred_element_type=jnp.float32) + b1_ref[...]
    h1 = jnp.maximum(h1, 0.0)
    # fc2 + ReLU
    h2 = jnp.dot(h1.astype(jnp.bfloat16), w2_ref[...],
                 preferred_element_type=jnp.float32) + b2_ref[...]
    h2 = jnp.maximum(h2, 0.0)
    # fc3 + tanh; only the first `act` lanes are real -> slice before tanh/store
    h3 = jnp.dot(h2.astype(jnp.bfloat16), w3_ref[...],
                 preferred_element_type=jnp.float32) + b3_ref[...]
    out_ref[...] = jnp.tanh(h3[:, :act])                   # narrow (tB, act) f32 store


def actor_forward(state, params, action_size, *, max_batch_tile=1024):
    """Actor forward pass. `state`: (B, state_size) f32 -> (B, action_size) f32."""
    w1, b1, w2, b2, w3, b3 = params
    B, S = state.shape
    assert S == w1.shape[0], "state_size mismatch with w1"
    assert action_size <= w3.shape[1]

    tile_b, Bp, n_tiles = _choose_tiling(B, max_batch_tile)

    if Bp == B:
        x = state                                   # stream f32 as-is, zero wrapper ops
    else:
        x = jnp.zeros((Bp, S), state.dtype).at[:B].set(state)   # batch pad only

    resident = lambda a: pl.BlockSpec(a.shape, lambda i: (0, 0))   # stays in VMEM

    out = pl.pallas_call(
        actor_kernel,
        out_shape=jax.ShapeDtypeStruct((Bp, action_size), jnp.float32),
        grid=(n_tiles,),
        in_specs=[
            # x streamed per batch tile; last dim == full array dim (no 128 pad)
            pl.BlockSpec((tile_b, S), lambda i: (i, 0)),
            resident(w1), resident(b1),
            resident(w2), resident(b2),
            resident(w3), resident(b3),
        ],
        # narrow, per-tile output; last dim == full array dim (= action_size)
        out_specs=pl.BlockSpec((tile_b, action_size), lambda i: (i, 0)),
        compiler_params=pltpu.CompilerParams(
            dimension_semantics=("parallel",)),        # megacore split on v7x
    )(x, w1, b1, w2, b2, w3, b3)

    return out if Bp == B else out[:B]


def init_actor_params(key, state_size, action_size, hidden_layers):
    """Deterministic init mirroring Actor.reset_parameters().

    hidden_init uses weight.size()[0] == out_features as "fan_in" (a quirk of
    the reference code); reproduced exactly.  Biases keep PyTorch's default
    Linear init U(-1/sqrt(in_features), 1/sqrt(in_features)) -- the reference
    reset_parameters() never touches them (including fc3.bias).

    Weights are stored as (in, out) so the kernel computes x @ W (== x @ W_pt.T).
    Per the perf review, w1 keeps its true contraction length K = state_size
    (no 128-lane padding of K); only output feature dims are padded to 128-lane
    multiples.  Matmul operands are bf16; biases stay f32.

    Returns (padded_bf16_params, raw_f32_params).
    """
    h1, h2 = hidden_layers
    k = jax.random.split(key, 6)

    lim1 = 1.0 / math.sqrt(h1)      # fan_in := out_features (per hidden_init quirk)
    lim2 = 1.0 / math.sqrt(h2)
    lim3 = 0.003

    w1 = jax.random.uniform(k[0], (state_size, h1), jnp.float32, -lim1, lim1)
    w2 = jax.random.uniform(k[1], (h1, h2), jnp.float32, -lim2, lim2)
    w3 = jax.random.uniform(k[2], (h2, action_size), jnp.float32, -lim3, lim3)

    b1 = jax.random.uniform(k[3], (1, h1), jnp.float32,
                            -1.0 / math.sqrt(state_size), 1.0 / math.sqrt(state_size))
    b2 = jax.random.uniform(k[4], (1, h2), jnp.float32,
                            -1.0 / math.sqrt(h1), 1.0 / math.sqrt(h1))
    b3 = jax.random.uniform(k[5], (1, action_size), jnp.float32,
                            -1.0 / math.sqrt(h2), 1.0 / math.sqrt(h2))

    H1p = _round_up(h1, 128)
    H2p = _round_up(h2, 128)
    Ap = _round_up(action_size, 128)

    def pad2(a, rows, cols, dtype):
        out = jnp.zeros((rows, cols), dtype)
        return out.at[: a.shape[0], : a.shape[1]].set(a.astype(dtype))

    padded = (
        pad2(w1, state_size, H1p, jnp.bfloat16),   # K left unpadded (review item 2)
        pad2(b1, 1, H1p, jnp.float32),
        pad2(w2, H1p, H2p, jnp.bfloat16),
        pad2(b2, 1, H2p, jnp.float32),
        pad2(w3, H2p, Ap, jnp.bfloat16),
        pad2(b3, 1, Ap, jnp.float32),
    )
    raw = (w1, b1, w2, b2, w3, b3)
    return padded, raw


def reference_forward(state, params, action_size):
    """Pure-JAX reference using the same bf16-operand / f32-accumulate math."""
    w1, b1, w2, b2, w3, b3 = params
    x = state.astype(jnp.bfloat16)
    h1 = jnp.maximum(jnp.dot(x, w1, preferred_element_type=jnp.float32) + b1, 0.0)
    h2 = jnp.maximum(jnp.dot(h1.astype(jnp.bfloat16), w2,
                             preferred_element_type=jnp.float32) + b2, 0.0)
    out = jnp.tanh(jnp.dot(h2.astype(jnp.bfloat16), w3,
                           preferred_element_type=jnp.float32) + b3)
    return out[:, :action_size]


def reference_forward_f32(state, raw_params):
    """Full-f32 reference (matches the true PyTorch Actor math up to fp error)."""
    w1, b1, w2, b2, w3, b3 = raw_params
    h1 = jnp.maximum(state @ w1 + b1, 0.0)
    h2 = jnp.maximum(h1 @ w2 + b2, 0.0)
    return jnp.tanh(h2 @ w3 + b3)


if __name__ == "__main__":
    # Small shapes consistent with the module's forward.
    batch = 4
    state_size = 8
    action_size = 4
    hidden_layers = [32, 32]

    key = jax.random.PRNGKey(0)
    k_state, k_params = jax.random.split(key)

    state = jax.random.normal(k_state, (batch, state_size), dtype=jnp.float32)
    params, raw_params = init_actor_params(k_params, state_size, action_size,
                                           hidden_layers)

    out = jax.block_until_ready(actor_forward(state, params, action_size))
    assert out.shape == (batch, action_size)

    # Exact-math check: same bf16-operand / f32-accumulate pipeline as kernel.
    ref = reference_forward(state, params, action_size)
    assert jnp.allclose(out, ref, atol=1e-4, rtol=1e-4), "mismatch vs bf16-math reference"

    # Drift check against the true f32 Actor math (bf16 operand quantization only).
    ref_f32 = reference_forward_f32(state, raw_params)
    assert jnp.allclose(out, ref_f32, atol=3e-2, rtol=0.0), "drift vs f32 reference"

    print("KERNEL_OK")
</pallas_src>

<mosaic_0001>
module attributes {stable_mosaic.version = 11 : i64} {
  func.func @actor_kernel(%arg0: i32, %arg1: memref<8x8xf32, #tpu.memory_space<vmem>>, %arg2: memref<8x128xbf16, #tpu.memory_space<vmem>>, %arg3: memref<1x128xf32, #tpu.memory_space<vmem>>, %arg4: memref<128x128xbf16, #tpu.memory_space<vmem>>, %arg5: memref<1x128xf32, #tpu.memory_space<vmem>>, %arg6: memref<128x128xbf16, #tpu.memory_space<vmem>>, %arg7: memref<1x128xf32, #tpu.memory_space<vmem>>, %arg8: memref<8x4xf32, #tpu.memory_space<vmem>>) attributes {dimension_semantics = [#tpu.dimension_semantics<parallel>], iteration_bounds = array<i64: 1>, scalar_prefetch = 0 : i64, scratch_operands = 0 : i64, tpu.core_type = #tpu.core_type<tc>, window_params = [{transform_indices = @transform_0, window_bounds = array<i64: 8, 8>}, {pipeline_mode = #tpu.pipeline_mode<synchronous>, transform_indices = @transform_1, window_bounds = array<i64: 8, 128>}, {pipeline_mode = #tpu.pipeline_mode<synchronous>, transform_indices = @transform_2, window_bounds = array<i64: 1, 128>}, {pipeline_mode = #tpu.pipeline_mode<synchronous>, transform_indices = @transform_3, window_bounds = array<i64: 128, 128>}, {pipeline_mode = #tpu.pipeline_mode<synchronous>, transform_indices = @transform_4, window_bounds = array<i64: 1, 128>}, {pipeline_mode = #tpu.pipeline_mode<synchronous>, transform_indices = @transform_5, window_bounds = array<i64: 128, 128>}, {pipeline_mode = #tpu.pipeline_mode<synchronous>, transform_indices = @transform_6, window_bounds = array<i64: 1, 128>}, {transform_indices = @transform_7, window_bounds = array<i64: 8, 4>}]} {
    %c0 = arith.constant 0 : index
    %c0_0 = arith.constant 0 : index
    %0 = vector.load %arg1[%c0, %c0_0] : memref<8x8xf32, #tpu.memory_space<vmem>>, vector<8x8xf32>
    %1 = arith.truncf %0 : vector<8x8xf32> to vector<8x8xbf16>
    %c0_1 = arith.constant 0 : index
    %c0_2 = arith.constant 0 : index
    %2 = vector.load %arg2[%c0_1, %c0_2] : memref<8x128xbf16, #tpu.memory_space<vmem>>, vector<8x128xbf16>
    %cst = arith.constant dense<0.000000e+00> : vector<8x128xf32>
    %3 = tpu.matmul %1, %2, %cst {dimension_numbers = #tpu.dot_dimension_numbers<[1], [0], [0], [1], [0, 0, 1, 1], [], []>} : vector<8x8xbf16>, vector<8x128xbf16>, vector<8x128xf32> -> vector<8x128xf32>
    %c0_3 = arith.constant 0 : index
    %c0_4 = arith.constant 0 : index
    %4 = vector.load %arg3[%c0_3, %c0_4] : memref<1x128xf32, #tpu.memory_space<vmem>>, vector<1x128xf32>
    %5 = vector.broadcast %4 : vector<1x128xf32> to vector<8x128xf32>
    %6 = arith.addf %3, %5 : vector<8x128xf32>
    %cst_5 = arith.constant 0.000000e+00 : f32
    %7 = vector.broadcast %cst_5 : f32 to vector<8x128xf32>
    %8 = arith.maximumf %6, %7 : vector<8x128xf32>
    %9 = arith.truncf %8 : vector<8x128xf32> to vector<8x128xbf16>
    %c0_6 = arith.constant 0 : index
    %c0_7 = arith.constant 0 : index
    %10 = vector.load %arg4[%c0_6, %c0_7] : memref<128x128xbf16, #tpu.memory_space<vmem>>, vector<128x128xbf16>
    %cst_8 = arith.constant dense<0.000000e+00> : vector<8x128xf32>
    %11 = tpu.matmul %9, %10, %cst_8 {dimension_numbers = #tpu.dot_dimension_numbers<[1], [0], [0], [1], [0, 0, 1, 1], [], []>} : vector<8x128xbf16>, vector<128x128xbf16>, vector<8x128xf32> -> vector<8x128xf32>
    %c0_9 = arith.constant 0 : index
    %c0_10 = arith.constant 0 : index
    %12 = vector.load %arg5[%c0_9, %c0_10] : memref<1x128xf32, #tpu.memory_space<vmem>>, vector<1x128xf32>
    %13 = vector.broadcast %12 : vector<1x128xf32> to vector<8x128xf32>
    %14 = arith.addf %11, %13 : vector<8x128xf32>
    %cst_11 = arith.constant 0.000000e+00 : f32
    %15 = vector.broadcast %cst_11 : f32 to vector<8x128xf32>
    %16 = arith.maximumf %14, %15 : vector<8x128xf32>
    %17 = arith.truncf %16 : vector<8x128xf32> to vector<8x128xbf16>
    %c0_12 = arith.constant 0 : index
    %c0_13 = arith.constant 0 : index
    %18 = vector.load %arg6[%c0_12, %c0_13] : memref<128x128xbf16, #tpu.memory_space<vmem>>, vector<128x128xbf16>
    %cst_14 = arith.constant dense<0.000000e+00> : vector<8x128xf32>
    %19 = tpu.matmul %17, %18, %cst_14 {dimension_numbers = #tpu.dot_dimension_numbers<[1], [0], [0], [1], [0, 0, 1, 1], [], []>} : vector<8x128xbf16>, vector<128x128xbf16>, vector<8x128xf32> -> vector<8x128xf32>
    %c0_15 = arith.constant 0 : index
    %c0_16 = arith.constant 0 : index
    %20 = vector.load %arg7[%c0_15, %c0_16] : memref<1x128xf32, #tpu.memory_space<vmem>>, vector<1x128xf32>
    %21 = vector.broadcast %20 : vector<1x128xf32> to vector<8x128xf32>
    %22 = arith.addf %19, %21 : vector<8x128xf32>
    %23 = vector.extract_strided_slice %22 {offsets = [0, 0], sizes = [8, 4], strides = [1, 1]} : vector<8x128xf32> to vector<8x4xf32>
    %24 = math.tanh %23 : vector<8x4xf32>
    %c0_17 = arith.constant 0 : index
    %c0_18 = arith.constant 0 : index
    %25 = vector.load %arg8[%c0_17, %c0_18] : memref<8x4xf32, #tpu.memory_space<vmem>>, vector<8x4xf32>
    tpu.vector_store %arg8[%c0_17, %c0_18], %24 {strides = array<i32>} : memref<8x4xf32, #tpu.memory_space<vmem>>, vector<8x4xf32>,
    return
  }
  func.func @transform_0(%arg0: i32) -> (i32, i32) {
    %c0_i32 = arith.constant 0 : i32
    %c0_i32_0 = arith.constant 0 : i32
    return %arg0, %c0_i32 : i32, i32
  }
  func.func @transform_1(%arg0: i32) -> (i32, i32) {
    %c0_i32 = arith.constant 0 : i32
    %c0_i32_0 = arith.constant 0 : i32
    %c0_i32_1 = arith.constant 0 : i32
    return %c0_i32, %c0_i32_0 : i32, i32
  }
  func.func @transform_2(%arg0: i32) -> (i32, i32) {
    %c0_i32 = arith.constant 0 : i32
    %c0_i32_0 = arith.constant 0 : i32
    %c0_i32_1 = arith.constant 0 : i32
    return %c0_i32, %c0_i32_0 : i32, i32
  }
  func.func @transform_3(%arg0: i32) -> (i32, i32) {
    %c0_i32 = arith.constant 0 : i32
    %c0_i32_0 = arith.constant 0 : i32
    %c0_i32_1 = arith.constant 0 : i32
    return %c0_i32, %c0_i32_0 : i32, i32
  }
  func.func @transform_4(%arg0: i32) -> (i32, i32) {
    %c0_i32 = arith.constant 0 : i32
    %c0_i32_0 = arith.constant 0 : i32
    %c0_i32_1 = arith.constant 0 : i32
    return %c0_i32, %c0_i32_0 : i32, i32
  }
  func.func @transform_5(%arg0: i32) -> (i32, i32) {
    %c0_i32 = arith.constant 0 : i32
    %c0_i32_0 = arith.constant 0 : i32
    %c0_i32_1 = arith.constant 0 : i32
    return %c0_i32, %c0_i32_0 : i32, i32
  }
  func.func @transform_6(%arg0: i32) -> (i32, i32) {
    %c0_i32 = arith.constant 0 : i32
    %c0_i32_0 = arith.constant 0 : i32
    %c0_i32_1 = arith.constant 0 : i32
    return %c0_i32, %c0_i32_0 : i32, i32
  }
  func.func @transform_7(%arg0: i32) -> (i32, i32) {
    %c0_i32 = arith.constant 0 : i32
    %c0_i32_0 = arith.constant 0 : i32
    return %arg0, %c0_i32 : i32, i32
  }
}

</mosaic_0001>

<llo_original>
// kernel: tpu_custom_call.1
$region0: #{tpu_custom_call.1}
  #allocation0 [shape = 'u32[]', space=smem, size = 0x4, offset = 0x4, fixed_abs, tag = 'smem constant byte address 0x4 - core index']
  #allocation1 [shape = 'u32[72,128]{1,0:T(1,128)}', space=vmem, size = 0x9000, scoped, tag = 'internal scratch']
  %s0 = inlined_call_operand.hbm [shape: f32[8,8], index: 0, kind: input, shape index: {}]
  %s1 = inlined_call_operand.hbm [shape: bf16[8,128], index: 1, kind: input, shape index: {}]
  %s2 = inlined_call_operand.vmem [shape: f32[1,128], index: 2, kind: input, shape index: {}]
  %s3 = inlined_call_operand.hbm [shape: bf16[128,128], index: 3, kind: input, shape index: {}]
  %s4 = inlined_call_operand.vmem [shape: f32[1,128], index: 4, kind: input, shape index: {}]
  %s5 = inlined_call_operand.hbm [shape: bf16[128,128], index: 5, kind: input, shape index: {}]
  %s6 = inlined_call_operand.vmem [shape: f32[1,128], index: 6, kind: input, shape index: {}]
  %s7 = inlined_call_operand.vmem [shape: f32[8,4], index: 7, kind: output, shape index: {}]
  %s8 = sld [smem:[#allocation0]]
  $region54: #{tpu_custom_call.1} parent=0
    _
  %s10 = ssub.s32 1, %s8
  %s11 = scalar_select 0, %s10, %s8
  $region1: #{tpu_custom_call.1} parent=0
    #allocation2 [shape = 'u8[4096]{0}', space=vmem, size = 0x1000, scoped, tag = 'input window, operand 0, single buffered']
    #allocation3 [shape = 's32[1]{0}', space=sflag, size = 0x4, scoped, tag = 'scoped memory for tpu_custom_call.1']
    #allocation4 [shape = 'u8[2048]{0}', space=vmem, size = 0x800, scoped, tag = 'input window, operand 1, single buffered']
    #allocation5 [shape = 's32[1]{0}', space=sflag, size = 0x4, scoped, tag = 'scoped memory for tpu_custom_call.1']
    #allocation6 [shape = 'u8[32768]{0}', space=vmem, size = 0x8000, scoped, tag = 'input window, operand 3, single buffered']
    #allocation7 [shape = 'u8[32768]{0}', space=vmem, size = 0x8000, scoped, tag = 'input window, operand 5, single buffered']
    #allocation8 [shape = 's32[1]{0}', space=sflag, size = 0x4, scoped, tag = 'scoped memory for tpu_custom_call.1']
    %12 = vsyncpa [#allocation3], 0
    %13 = vsyncpa [#allocation5], 0
    %14 = vsyncpa [#allocation8], 0
    // Predicated region
    $region2: #{tpu_custom_call.1} parent=1 // pred_check
      _
    $region3: #{tpu_custom_call.1} parent=1 // pred_check_branch
      %16 = sbr.rel (0) target = $region5
    $region4: #{tpu_custom_call.1} parent=1 // pred_region
      %18 = vsyncadd [#allocation3], 0
      %s20 = sshll.u32 %s0, 4
      %s21 = int_to_ptr.hbm [resolvable:$true] %s20
      %s22 = sshll.u32 [#allocation2], 4
      %s23 = int_to_ptr.vmem [resolvable:$true] %s22
      %25 = dma.hbm_to_vmem [thread:$0]  %s21, 128, %s23, [#allocation3]
    $region5: #{tpu_custom_call.1} parent=1 // pred_fallthru
      _
    // Predicated region
    $region6: #{tpu_custom_call.1} parent=1 // pred_check
      _
    $region7: #{tpu_custom_call.1} parent=1 // pred_check_branch
      %27 = sbr.rel (0) target = $region9
    $region8: #{tpu_custom_call.1} parent=1 // pred_region
      %29 = vsyncadd [#allocation5], 0
      %s31 = sshll.u32 %s1, 4
      %s32 = int_to_ptr.hbm [resolvable:$true] %s31
      %s33 = sshll.u32 [#allocation4], 4
      %s34 = int_to_ptr.vmem [resolvable:$true] %s33
      %36 = dma.hbm_to_vmem [thread:$0]  %s32, 64, %s34, [#allocation5]
    $region9: #{tpu_custom_call.1} parent=1 // pred_fallthru
      _
    // Predicated region
    $region10: #{tpu_custom_call.1} parent=1 // pred_check
      _
    $region11: #{tpu_custom_call.1} parent=1 // pred_check_branch
      %38 = sbr.rel (0) target = $region13
    $region12: #{tpu_custom_call.1} parent=1 // pred_region
      _
    $region13: #{tpu_custom_call.1} parent=1 // pred_fallthru
      _
    // Predicated region
    $region14: #{tpu_custom_call.1} parent=1 // pred_check
      _
    $region15: #{tpu_custom_call.1} parent=1 // pred_check_branch
      %40 = sbr.rel (0) target = $region17
    $region16: #{tpu_custom_call.1} parent=1 // pred_region
      %42 = vsyncadd [#allocation5], 0
      %s43 = sshll.u32 %s3, 4
      %s44 = int_to_ptr.hbm [resolvable:$true] %s43
      %s45 = sshll.u32 [#allocation6], 4
      %s46 = int_to_ptr.vmem [resolvable:$true] %s45
      %51 = dma.hbm_to_vmem [thread:$0]  %s44, 1024, %s46, [#allocation5], 64, 64, 4
    $region17: #{tpu_custom_call.1} parent=1 // pred_fallthru
      _
    // Predicated region
    $region18: #{tpu_custom_call.1} parent=1 // pred_check
      _
    $region19: #{tpu_custom_call.1} parent=1 // pred_check_branch
      %53 = sbr.rel (0) target = $region21
    $region20: #{tpu_custom_call.1} parent=1 // pred_region
      _
    $region21: #{tpu_custom_call.1} parent=1 // pred_fallthru
      _
    // Predicated region
    $region22: #{tpu_custom_call.1} parent=1 // pred_check
      _
    $region23: #{tpu_custom_call.1} parent=1 // pred_check_branch
      %55 = sbr.rel (0) target = $region25
    $region24: #{tpu_custom_call.1} parent=1 // pred_region
      %57 = vsyncadd [#allocation8], 0
      %s58 = sshll.u32 %s5, 4
      %s59 = int_to_ptr.hbm [resolvable:$true] %s58
      %s60 = sshll.u32 [#allocation7], 4
      %s61 = int_to_ptr.vmem [resolvable:$true] %s60
      %66 = dma.hbm_to_vmem [thread:$0]  %s59, 1024, %s61, [#allocation8], 64, 64, 4
    $region25: #{tpu_custom_call.1} parent=1 // pred_fallthru
      _
    // Predicated region
    $region26: #{tpu_custom_call.1} parent=1 // pred_check
      _
    $region27: #{tpu_custom_call.1} parent=1 // pred_check_branch
      %68 = sbr.rel (0) target = $region29
    $region28: #{tpu_custom_call.1} parent=1 // pred_region
      _
    $region29: #{tpu_custom_call.1} parent=1 // pred_fallthru
      _
    // Predicated region
    $region30: #{tpu_custom_call.1} parent=1 // pred_check
      _
    $region31: #{tpu_custom_call.1} parent=1 // pred_check_branch
      %70 = sbr.rel (0) target = $region33
    $region32: #{tpu_custom_call.1} parent=1 // pred_region
      %72 = dma.done [#allocation3], 128
    $region33: #{tpu_custom_call.1} parent=1 // pred_fallthru
      _
    // Predicated region
    $region34: #{tpu_custom_call.1} parent=1 // pred_check
      _
    $region35: #{tpu_custom_call.1} parent=1 // pred_check_branch
      %74 = sbr.rel (0) target = $region37
    $region36: #{tpu_custom_call.1} parent=1 // pred_region
      %76 = dma.done [#allocation5], 64
    $region37: #{tpu_custom_call.1} parent=1 // pred_fallthru
      _
    // Predicated region
    $region38: #{tpu_custom_call.1} parent=1 // pred_check
      _
    $region39: #{tpu_custom_call.1} parent=1 // pred_check_branch
      %78 = sbr.rel (0) target = $region41
    $region40: #{tpu_custom_call.1} parent=1 // pred_region
      %80 = dma.done [#allocation5], 1024
    $region41: #{tpu_custom_call.1} parent=1 // pred_fallthru
      _
    // Predicated region
    $region42: #{tpu_custom_call.1} parent=1 // pred_check
      _
    $region43: #{tpu_custom_call.1} parent=1 // pred_check_branch
      %82 = sbr.rel (0) target = $region45
    $region44: #{tpu_custom_call.1} parent=1 // pred_region
      %84 = dma.done [#allocation8], 1024
    $region45: #{tpu_custom_call.1} parent=1 // pred_fallthru
      _
    %v86 = vld [vmem:[#allocation2] sm:$0xff]
    %v87 = vpack.c.bf16 %v86, %v86
    %v88 = vld [vmem:[#allocation4] sm:$0xf]
    %v89 = vld [vmem:[%s2] sm:$0x1]
    %v91 = vperm.slane %v89, 0
    %vm93 = vcmask 64512
    %v95 = vsel %vm93, %v87, 0
    %vm97 = vcmask 1043456
    %v99 = vsel %vm97, %v88, 0
    %101 = vmatpush.bf16.msra.mxu0 0
    %102 = vmatpush.bf16.msra.mxu0 0
    %103 = vmatpush.bf16.msra.mxu0 0
    %104 = vmatpush.bf16.msra.mxu0 0
    %105 = vmatpush.bf16.msra.mxu0 0
    %106 = vmatpush.bf16.msra.mxu0 0
    %107 = vmatpush.bf16.msra.mxu0 0
    %108 = vmatpush.bf16.msra.mxu0 %v99
    %109 = vmatmul.bf16.gmra.mxu0 %v95
    %v110 = vpop.f32.mrf.mxu0
    %v111 = vadd.f32 %v91, %v110
    %v112 = vpop.f32.mrf.mxu0
    %113 = vdwg.mxu0
    %v114 = vmax.f32 %v111, 0.0
    %v115 = vpack.c.bf16 %v114, %v114
    %v116 = vld [vmem:[#allocation6] sm:$0xf]
    %v117 = vld [vmem:[#allocation6 + $0x4] sm:$0xf]
    %v118 = vld [vmem:[#allocation6 + $0x8] sm:$0xf]
    %v119 = vld [vmem:[#allocation6 + $0xc] sm:$0xf]
    %v120 = vld [vmem:[#allocation6 + $0x10] sm:$0xf]
    %v121 = vld [vmem:[#allocation6 + $0x14] sm:$0xf]
    %v122 = vld [vmem:[#allocation6 + $0x18] sm:$0xf]
    %v123 = vld [vmem:[#allocation6 + $0x1c] sm:$0xf]
    %v124 = vld [vmem:[#allocation6 + $0x20] sm:$0xf]
    %v125 = vld [vmem:[#allocation6 + $0x24] sm:$0xf]
    %v126 = vld [vmem:[#allocation6 + $0x28] sm:$0xf]
    %v127 = vld [vmem:[#allocation6 + $0x2c] sm:$0xf]
    %v128 = vld [vmem:[#allocation6 + $0x30] sm:$0xf]
    %v129 = vld [vmem:[#allocation6 + $0x34] sm:$0xf]
    %v130 = vld [vmem:[#allocation6 + $0x38] sm:$0xf]
    %v131 = vld [vmem:[#allocation6 + $0x3c] sm:$0xf]
    %v132 = vld [vmem:[%s4] sm:$0x1]
    %v134 = vperm.slane %v132, 0
    %v152 = vunpack.c.l.b16 %v116
    %v153 = vunpack.c.l.b16 %v117
    %v154 = vunpack.c.l.b16 %v118
    %v155 = vunpack.c.l.b16 %v119
    %v156 = vunpack.c.l.b16 %v120
    %v157 = vunpack.c.l.b16 %v121
    %v158 = vunpack.c.l.b16 %v122
    %v159 = vunpack.c.l.b16 %v123
    %v160 = vunpack.c.l.b16 %v124
    %v161 = vunpack.c.l.b16 %v125
    %v162 = vunpack.c.l.b16 %v126
    %v163 = vunpack.c.l.b16 %v127
    %v164 = vunpack.c.l.b16 %v128
    %v165 = vunpack.c.l.b16 %v129
    %v166 = vunpack.c.l.b16 %v130
    %v167 = vunpack.c.l.b16 %v131
    %v168 = vpack.c.b16 %v153, %v152
    %v169 = vpack.c.b16 %v155, %v154
    %v170 = vpack.c.b16 %v157, %v156
    %v171 = vpack.c.b16 %v159, %v158
    %v172 = vpack.c.b16 %v161, %v160
    %v173 = vpack.c.b16 %v163, %v162
    %v174 = vpack.c.b16 %v165, %v164
    %v175 = vpack.c.b16 %v167, %v166
    %184 = vmatpush.bf16.msra.mxu0 %v175
    %185 = vmatpush.bf16.msra.mxu0 %v174
    %186 = vmatpush.bf16.msra.mxu0 %v173
    %187 = vmatpush.bf16.msra.mxu0 %v172
    %188 = vmatpush.bf16.msra.mxu0 %v171
    %189 = vmatpush.bf16.msra.mxu0 %v170
    %190 = vmatpush.bf16.msra.mxu0 %v169
    %191 = vmatpush.bf16.msra.mxu0 %v168
    %192 = vmatmul.bf16.gmra.mxu0 %v115
    %v193 = vpop.f32.mrf.mxu0
    %v194 = vadd.f32 %v134, %v193
    %v195 = vpop.f32.mrf.mxu0
    %196 = vdwg.mxu0
    %v197 = vmax.f32 %v194, 0.0
    %v198 = vpack.c.bf16 %v197, %v197
    %v199 = vld [vmem:[#allocation7] sm:$0xf]
    %v200 = vld [vmem:[#allocation7 + $0x4] sm:$0xf]
    %v201 = vld [vmem:[#allocation7 + $0x8] sm:$0xf]
    %v202 = vld [vmem:[#allocation7 + $0xc] sm:$0xf]
    %v203 = vld [vmem:[#allocation7 + $0x10] sm:$0xf]
    %v204 = vld [vmem:[#allocation7 + $0x14] sm:$0xf]
    %v205 = vld [vmem:[#allocation7 + $0x18] sm:$0xf]
    %v206 = vld [vmem:[#allocation7 + $0x1c] sm:$0xf]
    %v207 = vld [vmem:[#allocation7 + $0x20] sm:$0xf]
    %v208 = vld [vmem:[#allocation7 + $0x24] sm:$0xf]
    %v209 = vld [vmem:[#allocation7 + $0x28] sm:$0xf]
    %v210 = vld [vmem:[#allocation7 + $0x2c] sm:$0xf]
    %v211 = vld [vmem:[#allocation7 + $0x30] sm:$0xf]
    %v212 = vld [vmem:[#allocation7 + $0x34] sm:$0xf]
    %v213 = vld [vmem:[#allocation7 + $0x38] sm:$0xf]
    %v214 = vld [vmem:[#allocation7 + $0x3c] sm:$0xf]
    %v215 = vld [vmem:[%s6] sm:$0x1]
    %v217 = vperm.slane %v215, 0
    %v235 = vunpack.c.l.b16 %v199
    %v236 = vunpack.c.l.b16 %v200
    %v237 = vunpack.c.l.b16 %v201
    %v238 = vunpack.c.l.b16 %v202
    %v239 = vunpack.c.l.b16 %v203
    %v240 = vunpack.c.l.b16 %v204
    %v241 = vunpack.c.l.b16 %v205
    %v242 = vunpack.c.l.b16 %v206
    %v243 = vunpack.c.l.b16 %v207
    %v244 = vunpack.c.l.b16 %v208
    %v245 = vunpack.c.l.b16 %v209
    %v246 = vunpack.c.l.b16 %v210
    %v247 = vunpack.c.l.b16 %v211
    %v248 = vunpack.c.l.b16 %v212
    %v249 = vunpack.c.l.b16 %v213
    %v250 = vunpack.c.l.b16 %v214
    %v251 = vpack.c.b16 %v236, %v235
    %v252 = vpack.c.b16 %v238, %v237
    %v253 = vpack.c.b16 %v240, %v239
    %v254 = vpack.c.b16 %v242, %v241
    %v255 = vpack.c.b16 %v244, %v243
    %v256 = vpack.c.b16 %v246, %v245
    %v257 = vpack.c.b16 %v248, %v247
    %v258 = vpack.c.b16 %v250, %v249
    %267 = vmatpush.bf16.msra.mxu0 %v258
    %268 = vmatpush.bf16.msra.mxu0 %v257
    %269 = vmatpush.bf16.msra.mxu0 %v256
    %270 = vmatpush.bf16.msra.mxu0 %v255
    %271 = vmatpush.bf16.msra.mxu0 %v254
    %272 = vmatpush.bf16.msra.mxu0 %v253
    %273 = vmatpush.bf16.msra.mxu0 %v252
    %274 = vmatpush.bf16.msra.mxu0 %v251
    %275 = vmatmul.bf16.gmra.mxu0 %v198
    %v276 = vpop.f32.mrf.mxu0
    %v277 = vadd.f32 %v217, %v276
    %v278 = vpop.f32.mrf.mxu0
    %279 = vdwg.mxu0
    %v280 = vtanh.pop %v277
    %vm281 = vcmask 31744
    %282 = vst.msk [vmem:[%s7] sm:$0xff] %vm281, %v280
    // Predicated region
    $region46: #{tpu_custom_call.1} parent=1 // pred_check
      _
    $region47: #{tpu_custom_call.1} parent=1 // pred_check_branch
      %284 = sbr.rel (0) target = $region49
    $region48: #{tpu_custom_call.1} parent=1 // pred_region
      _
    $region49: #{tpu_custom_call.1} parent=1 // pred_fallthru
      _
    // Predicated region
    $region50: #{tpu_custom_call.1} parent=1 // pred_check
      _
    $region51: #{tpu_custom_call.1} parent=1 // pred_check_branch
      %286 = sbr.rel (0) target = $region53
    $region52: #{tpu_custom_call.1} parent=1 // pred_region
      _
    $region53: #{tpu_custom_call.1} parent=1 // pred_fallthru
      _
    %287 = vsyncpa [#allocation3], 1
    %288 = vsyncpa [#allocation5], 1
    %289 = vsyncpa [#allocation8], 1

</llo_original>
